<compile_context>
chip_gen: v7x
topology: tpu7x:2x2x1
jax: 0.10.0
libtpu: 0.0.40
codegen_flags: <defaults>
</compile_context>

<pallas_src>
import jax
import jax.numpy as jnp
from jax.experimental import pallas as pl
from jax.experimental.pallas import tpu as pltpu


def _round_up(x, m):
    return (x + m - 1) // m * m


def _vmem_capacity_bytes():
    """Per-core VMEM capacity; conservative 64 MiB fallback (v7x-safe)."""
    try:
        cap = int(pltpu.get_tpu_info().vmem_capacity_bytes)
        if cap > 0:
            return cap
    except Exception:
        pass
    return 64 << 20


def make_cnn_kernel(k_max, w_out_pad):
    """Fused im2col-conv (all branches) -> relu -> masked max-pool -> fc -> relu."""

    def kernel(emb_ref, wconv_ref, bconv_ref, valid_ref, wfc_ref, bfc_ref, out_ref):
        emb = emb_ref[...]                                       # (TN, W_PAD, E) bf16

        # im2col: K_max word-shifted views lane-concatenated -> one wide
        # contraction (K_max*E) matmul on the MXU (f32 accumulation).
        pieces = [emb[:, k:k + w_out_pad, :] for k in range(k_max)]
        col = pieces[0] if k_max == 1 else jnp.concatenate(pieces, axis=-1)
        y = jax.lax.dot_general(
            col, wconv_ref[...],                                  # (K_max*E, F_TOT) bf16
            dimension_numbers=(((2,), (0,)), ((), ())),
            preferred_element_type=jnp.float32)                   # (TN, W_out, F_TOT)

        conv = jnp.maximum(y + bconv_ref[...][None, :, :], 0.0)   # bias + ReLU
        conv = conv * valid_ref[...][None, :, :]                  # zero partial/padded windows
        pooled = jnp.max(conv, axis=1)                            # (TN, F_TOT) global max-pool

        # concat + fc collapsed into one lane-dense matmul, then ReLU.
        fc = jnp.dot(pooled.astype(wfc_ref.dtype), wfc_ref[...],
                     preferred_element_type=jnp.float32) + bfc_ref[...]
        out_ref[...] = jnp.maximum(fc, 0.0)

    return kernel


def cnn_feature_extractor(x_ids, umask, params, kernel_sizes, feature_dim,
                          filters, compute_dtype=jnp.bfloat16):
    """JAX wrapper mirroring CNNFeatureExtractor.forward (eval mode).

    x_ids: (num_utt, batch, num_words) int32 token ids
    umask: (batch, num_utt) float mask
    returns: (batch, num_utt, feature_dim) float32
    """
    num_utt, batch, num_words = x_ids.shape
    n = num_utt * batch
    n_conv = len(kernel_sizes)
    k_max = max(kernel_sizes)

    emb_tbl = params["embedding"].astype(compute_dtype)
    e_dim = emb_tbl.shape[1]
    itemsize = jnp.dtype(compute_dtype).itemsize

    w_out_pad = _round_up(num_words, 8)                  # conv-output positions kept
    w_pad = _round_up(w_out_pad + k_max - 1, 8)          # room for the k-shifted views
    f_tot = _round_up(n_conv * filters, 128)             # lane-fused conv channels
    out_pad = _round_up(feature_dim, 128)                 # lane-dense fc output
    k_e = k_max * e_dim                                    # im2col contraction depth

    # ---- generation-aware VMEM budget + corrected accounting -----------------
    vmem_cap = _vmem_capacity_bytes()
    budget = int(vmem_cap * 0.60)                          # ~38 MiB v7x, ~77 MiB v5e/v6e
    vmem_limit = min(int(vmem_cap * 0.85), vmem_cap - (8 << 20))

    e_lane = _round_up(e_dim, 128)                         # VMEM lane-pads the E axis
    col_lane = _round_up(k_e, 128)
    bytes_per_row = (
        2 * w_pad * e_lane * itemsize                      # emb tile, double-buffered
        + k_max * w_out_pad * e_lane * itemsize            # shifted views (pre-concat)
        + w_out_pad * col_lane * itemsize                  # im2col operand
        + w_out_pad * f_tot * 4                            # f32 matmul result
        + 2 * out_pad * 4                                  # output slab, double-buffered
        + 4 * f_tot * 4)                                   # pooled / small temporaries
    weight_bytes = 2 * (                                    # resident blocks double-buffer
        (_round_up(k_e, 8) * f_tot + f_tot * out_pad) * itemsize
        + (8 + w_out_pad) * f_tot * 4                      # conv bias + valid mask
        + 8 * out_pad * 4)                                 # fc bias

    avail = max(budget - weight_bytes, 0)
    n8 = _round_up(n, 8)
    tile_n = min(n8, max(8, (avail // bytes_per_row) // 8 * 8))
    # Keep >=4 grid steps when possible so "parallel" actually splits over the
    # two v7x TensorCores.
    split_cap = max(8, _round_up(-(-n8 // 4), 8))
    tile_n = min(tile_n, split_cap)
    n_pad = _round_up(n, tile_n)

    # ---- embedding gather (bf16) + N/W zero padding --------------------------
    ids = x_ids.reshape(n, num_words)
    emb = jnp.take(emb_tbl, ids, axis=0)                   # (N, W, E) bf16
    emb = jnp.pad(emb, ((0, n_pad - n), (0, w_pad - num_words), (0, 0)))

    # ---- fuse all conv branches into one lane-padded im2col weight -----------
    w_fused = jnp.zeros((k_max, e_dim, f_tot), jnp.float32)
    b_fused = jnp.zeros((1, f_tot), jnp.float32)
    valid = jnp.zeros((w_out_pad, f_tot), jnp.float32)
    for idx, K in enumerate(kernel_sizes):
        lo = idx * filters
        w_fused = w_fused.at[:K, :, lo:lo + filters].set(params[f"conv{K}_w"])
        b_fused = b_fused.at[:, lo:lo + filters].set(params[f"conv{K}_b"])
        valid = valid.at[:num_words - K + 1, lo:lo + filters].set(1.0)
    w_im2col = w_fused.reshape(k_e, f_tot).astype(compute_dtype)

    wfc = jnp.zeros((f_tot, out_pad), jnp.float32)
    wfc = wfc.at[:n_conv * filters, :feature_dim].set(params["fc_w"])
    wfc = wfc.astype(compute_dtype)
    bfc = jnp.zeros((1, out_pad), jnp.float32)
    bfc = bfc.at[:, :feature_dim].set(params["fc_b"])

    kernel = make_cnn_kernel(k_max, w_out_pad)

    out = pl.pallas_call(
        kernel,
        out_shape=jax.ShapeDtypeStruct((n_pad, out_pad), jnp.float32),
        grid=(n_pad // tile_n,),
        in_specs=[
            pl.BlockSpec((tile_n, w_pad, e_dim), lambda i: (i, 0, 0)),   # emb tile (streams)
            pl.BlockSpec((k_e, f_tot), lambda i: (0, 0)),                # im2col conv W (resident)
            pl.BlockSpec((1, f_tot), lambda i: (0, 0)),                  # fused conv b
            pl.BlockSpec((w_out_pad, f_tot), lambda i: (0, 0)),          # valid-position mask
            pl.BlockSpec((f_tot, out_pad), lambda i: (0, 0)),            # fc W (lane padded)
            pl.BlockSpec((1, out_pad), lambda i: (0, 0)),                # fc b
        ],
        out_specs=pl.BlockSpec((tile_n, out_pad), lambda i: (i, 0)),     # lane-dense output slab
        compiler_params=pltpu.CompilerParams(
            dimension_semantics=("parallel",),
            vmem_limit_bytes=vmem_limit),
    )(emb, w_im2col, b_fused, valid, wfc, bfc)

    # utterance mask (umask.unsqueeze(-1).transpose(0,1)) applied on the small
    # sliced output, then reshape + permute(1, 0, 2).
    mask = umask.astype(jnp.float32).T.reshape(n, 1)
    feat = out[:n, :feature_dim] * mask
    feat = feat.reshape(num_utt, batch, feature_dim)
    return jnp.transpose(feat, (1, 0, 2))


def reference(x_ids, umask, params, kernel_sizes, feature_dim, filters,
              compute_dtype=jnp.bfloat16):
    """Pure-JAX reference replicating the PyTorch forward (eval mode), with the
    same bf16 rounding points as the kernel so the comparison is tight."""
    num_utt, batch, num_words = x_ids.shape
    n = num_utt * batch
    ids = x_ids.reshape(n, num_words)
    emb = jnp.take(params["embedding"].astype(compute_dtype), ids,
                   axis=0).astype(jnp.float32)                # (N, W, E)
    pooled = []
    for K in kernel_sizes:
        w = params[f"conv{K}_w"].astype(compute_dtype).astype(jnp.float32)  # (K, E, F)
        b = params[f"conv{K}_b"][0]
        l_out = num_words - K + 1
        acc = jnp.zeros((n, l_out, filters), jnp.float32)
        for k in range(K):
            acc = acc + jnp.einsum("nwe,ef->nwf", emb[:, k:k + l_out, :], w[k])
        pooled.append(jnp.max(jax.nn.relu(acc + b), axis=1))
    concated = jnp.concatenate(pooled, axis=1)
    concated = concated.astype(compute_dtype).astype(jnp.float32)
    wfc = params["fc_w"].astype(compute_dtype).astype(jnp.float32)
    feat = jax.nn.relu(concated @ wfc + params["fc_b"][0])
    feat = feat.reshape(num_utt, batch, feature_dim)
    feat = feat * umask.astype(jnp.float32).T[:, :, None]
    return jnp.transpose(feat, (1, 0, 2))


if __name__ == "__main__":
    # Module hyper-parameters (small, consistent with the PyTorch __init__).
    vocab_size = 100
    embedding_dim = 32
    output_size = 32
    filters = 16
    kernel_sizes = (3, 4, 5)
    num_utt, batch, num_words = 4, 2, 8

    key = jax.random.PRNGKey(0)
    keys = jax.random.split(key, 4 + 2 * len(kernel_sizes))

    params = {
        "embedding": jax.random.normal(keys[0], (vocab_size, embedding_dim),
                                       jnp.float32) * 0.1,
        # fc weight stored transposed: (in, out)
        "fc_w": jax.random.normal(keys[1], (len(kernel_sizes) * filters, output_size),
                                  jnp.float32) * 0.1,
        "fc_b": jax.random.normal(keys[2], (1, output_size), jnp.float32) * 0.1,
    }
    # Conv1d weights: PyTorch shape (filters, embedding_dim, K) -> stored as (K, E, F).
    for i, K in enumerate(kernel_sizes):
        params[f"conv{K}_w"] = jax.random.normal(
            keys[3 + 2 * i], (K, embedding_dim, filters), jnp.float32) * 0.1
        params[f"conv{K}_b"] = jax.random.normal(
            keys[4 + 2 * i], (1, filters), jnp.float32) * 0.1

    x_ids = jax.random.randint(keys[-1], (num_utt, batch, num_words), 0, vocab_size,
                               dtype=jnp.int32)
    umask = jnp.array([[1.0, 1.0, 1.0, 0.0],
                       [1.0, 1.0, 0.0, 0.0]], dtype=jnp.float32)  # (batch, num_utt)

    out = cnn_feature_extractor(x_ids, umask, params, kernel_sizes, output_size,
                                filters)
    out = jax.block_until_ready(out)

    ref = reference(x_ids, umask, params, kernel_sizes, output_size, filters)
    assert out.shape == (batch, num_utt, output_size), out.shape
    assert jnp.allclose(out, ref, atol=1e-2, rtol=1e-2), "mismatch vs reference"

    print("KERNEL_OK")
</pallas_src>

<mosaic_0001>
module attributes {stable_mosaic.version = 11 : i64} {
  func.func @kernel(%arg0: i32, %arg1: memref<8x16x32xbf16, #tpu.memory_space<vmem>>, %arg2: memref<160x128xbf16, #tpu.memory_space<vmem>>, %arg3: memref<1x128xf32, #tpu.memory_space<vmem>>, %arg4: memref<8x128xf32, #tpu.memory_space<vmem>>, %arg5: memref<128x128xbf16, #tpu.memory_space<vmem>>, %arg6: memref<1x128xf32, #tpu.memory_space<vmem>>, %arg7: memref<8x128xf32, #tpu.memory_space<vmem>>) attributes {dimension_semantics = [#tpu.dimension_semantics<parallel>], iteration_bounds = array<i64: 1>, scalar_prefetch = 0 : i64, scratch_operands = 0 : i64, tpu.core_type = #tpu.core_type<tc>, window_params = [{transform_indices = @transform_0, window_bounds = array<i64: 8, 16, 32>}, {pipeline_mode = #tpu.pipeline_mode<synchronous>, transform_indices = @transform_1, window_bounds = array<i64: 160, 128>}, {pipeline_mode = #tpu.pipeline_mode<synchronous>, transform_indices = @transform_2, window_bounds = array<i64: 1, 128>}, {pipeline_mode = #tpu.pipeline_mode<synchronous>, transform_indices = @transform_3, window_bounds = array<i64: 8, 128>}, {pipeline_mode = #tpu.pipeline_mode<synchronous>, transform_indices = @transform_4, window_bounds = array<i64: 128, 128>}, {pipeline_mode = #tpu.pipeline_mode<synchronous>, transform_indices = @transform_5, window_bounds = array<i64: 1, 128>}, {transform_indices = @transform_6, window_bounds = array<i64: 8, 128>}]} {
    %c0 = arith.constant 0 : index
    %c0_0 = arith.constant 0 : index
    %c0_1 = arith.constant 0 : index
    %0 = vector.load %arg1[%c0, %c0_0, %c0_1] : memref<8x16x32xbf16, #tpu.memory_space<vmem>>, vector<8x16x32xbf16>
    %1 = vector.extract_strided_slice %0 {offsets = [0, 0, 0], sizes = [8, 8, 32], strides = [1, 1, 1]} : vector<8x16x32xbf16> to vector<8x8x32xbf16>
    %2 = vector.extract_strided_slice %0 {offsets = [0, 1, 0], sizes = [8, 8, 32], strides = [1, 1, 1]} : vector<8x16x32xbf16> to vector<8x8x32xbf16>
    %3 = vector.extract_strided_slice %0 {offsets = [0, 2, 0], sizes = [8, 8, 32], strides = [1, 1, 1]} : vector<8x16x32xbf16> to vector<8x8x32xbf16>
    %4 = vector.extract_strided_slice %0 {offsets = [0, 3, 0], sizes = [8, 8, 32], strides = [1, 1, 1]} : vector<8x16x32xbf16> to vector<8x8x32xbf16>
    %5 = vector.extract_strided_slice %0 {offsets = [0, 4, 0], sizes = [8, 8, 32], strides = [1, 1, 1]} : vector<8x16x32xbf16> to vector<8x8x32xbf16>
    %6 = tpu.concatenate %1, %2, %3, %4, %5 in 2 : vector<8x8x32xbf16>, vector<8x8x32xbf16>, vector<8x8x32xbf16>, vector<8x8x32xbf16>, vector<8x8x32xbf16> -> vector<8x8x160xbf16>
    %c0_2 = arith.constant 0 : index
    %c0_3 = arith.constant 0 : index
    %7 = vector.load %arg2[%c0_2, %c0_3] : memref<160x128xbf16, #tpu.memory_space<vmem>>, vector<160x128xbf16>
    %cst = arith.constant dense<0.000000e+00> : vector<8x8x128xf32>
    %8 = tpu.matmul %6, %7, %cst {dimension_numbers = #tpu.dot_dimension_numbers<[2], [0], [0, 1], [1], [0, 0, 0, 1, 1, 1], [], []>} : vector<8x8x160xbf16>, vector<160x128xbf16>, vector<8x8x128xf32> -> vector<8x8x128xf32>
    %c0_4 = arith.constant 0 : index
    %c0_5 = arith.constant 0 : index
    %9 = vector.load %arg3[%c0_4, %c0_5] : memref<1x128xf32, #tpu.memory_space<vmem>>, vector<1x128xf32>
    %10 = vector.shape_cast %9 : vector<1x128xf32> to vector<1x1x128xf32>
    %11 = vector.broadcast %10 : vector<1x1x128xf32> to vector<8x8x128xf32>
    %12 = arith.addf %8, %11 : vector<8x8x128xf32>
    %cst_6 = arith.constant 0.000000e+00 : f32
    %13 = vector.broadcast %cst_6 : f32 to vector<8x8x128xf32>
    %14 = arith.maximumf %12, %13 : vector<8x8x128xf32>
    %c0_7 = arith.constant 0 : index
    %c0_8 = arith.constant 0 : index
    %15 = vector.load %arg4[%c0_7, %c0_8] : memref<8x128xf32, #tpu.memory_space<vmem>>, vector<8x128xf32>
    %16 = vector.shape_cast %15 : vector<8x128xf32> to vector<1x8x128xf32>
    %17 = vector.broadcast %16 : vector<1x8x128xf32> to vector<8x8x128xf32>
    %18 = arith.mulf %14, %17 : vector<8x8x128xf32>
    %cst_9 = arith.constant dense<0xFF800000> : vector<8x128xf32>
    %19 = vector.multi_reduction <maximumf>, %18, %cst_9 [1] : vector<8x8x128xf32> to vector<8x128xf32>
    %20 = arith.truncf %19 : vector<8x128xf32> to vector<8x128xbf16>
    %c0_10 = arith.constant 0 : index
    %c0_11 = arith.constant 0 : index
    %21 = vector.load %arg5[%c0_10, %c0_11] : memref<128x128xbf16, #tpu.memory_space<vmem>>, vector<128x128xbf16>
    %cst_12 = arith.constant dense<0.000000e+00> : vector<8x128xf32>
    %22 = tpu.matmul %20, %21, %cst_12 {dimension_numbers = #tpu.dot_dimension_numbers<[1], [0], [0], [1], [0, 0, 1, 1], [], []>} : vector<8x128xbf16>, vector<128x128xbf16>, vector<8x128xf32> -> vector<8x128xf32>
    %c0_13 = arith.constant 0 : index
    %c0_14 = arith.constant 0 : index
    %23 = vector.load %arg6[%c0_13, %c0_14] : memref<1x128xf32, #tpu.memory_space<vmem>>, vector<1x128xf32>
    %24 = vector.broadcast %23 : vector<1x128xf32> to vector<8x128xf32>
    %25 = arith.addf %22, %24 : vector<8x128xf32>
    %cst_15 = arith.constant 0.000000e+00 : f32
    %26 = vector.broadcast %cst_15 : f32 to vector<8x128xf32>
    %27 = arith.maximumf %25, %26 : vector<8x128xf32>
    %c0_16 = arith.constant 0 : index
    %c0_17 = arith.constant 0 : index
    %28 = vector.load %arg7[%c0_16, %c0_17] : memref<8x128xf32, #tpu.memory_space<vmem>>, vector<8x128xf32>
    tpu.vector_store %arg7[%c0_16, %c0_17], %27 {strides = array<i32>} : memref<8x128xf32, #tpu.memory_space<vmem>>, vector<8x128xf32>,
    return
  }
  func.func @transform_0(%arg0: i32) -> (i32, i32, i32) {
    %c0_i32 = arith.constant 0 : i32
    %c0_i32_0 = arith.constant 0 : i32
    %c0_i32_1 = arith.constant 0 : i32
    return %arg0, %c0_i32, %c0_i32_0 : i32, i32, i32
  }
  func.func @transform_1(%arg0: i32) -> (i32, i32) {
    %c0_i32 = arith.constant 0 : i32
    %c0_i32_0 = arith.constant 0 : i32
    %c0_i32_1 = arith.constant 0 : i32
    return %c0_i32, %c0_i32_0 : i32, i32
  }
  func.func @transform_2(%arg0: i32) -> (i32, i32) {
    %c0_i32 = arith.constant 0 : i32
    %c0_i32_0 = arith.constant 0 : i32
    %c0_i32_1 = arith.constant 0 : i32
    return %c0_i32, %c0_i32_0 : i32, i32
  }
  func.func @transform_3(%arg0: i32) -> (i32, i32) {
    %c0_i32 = arith.constant 0 : i32
    %c0_i32_0 = arith.constant 0 : i32
    %c0_i32_1 = arith.constant 0 : i32
    return %c0_i32, %c0_i32_0 : i32, i32
  }
  func.func @transform_4(%arg0: i32) -> (i32, i32) {
    %c0_i32 = arith.constant 0 : i32
    %c0_i32_0 = arith.constant 0 : i32
    %c0_i32_1 = arith.constant 0 : i32
    return %c0_i32, %c0_i32_0 : i32, i32
  }
  func.func @transform_5(%arg0: i32) -> (i32, i32) {
    %c0_i32 = arith.constant 0 : i32
    %c0_i32_0 = arith.constant 0 : i32
    %c0_i32_1 = arith.constant 0 : i32
    return %c0_i32, %c0_i32_0 : i32, i32
  }
  func.func @transform_6(%arg0: i32) -> (i32, i32) {
    %c0_i32 = arith.constant 0 : i32
    %c0_i32_0 = arith.constant 0 : i32
    return %arg0, %c0_i32 : i32, i32
  }
}

</mosaic_0001>

<llo_original>
// kernel: tpu_custom_call.1
$region0: #{tpu_custom_call.1}
  #allocation0 [shape = 'u32[]', space=smem, size = 0x4, offset = 0x4, fixed_abs, tag = 'smem constant byte address 0x4 - core index']
  #allocation1 [shape = 'u32[144,128]{1,0:T(1,128)}', space=vmem, size = 0x12000, scoped, tag = 'internal scratch']
  %s0 = inlined_call_operand.hbm [shape: bf16[8,16,32], index: 0, kind: input, shape index: {}]
  %s1 = inlined_call_operand.hbm [shape: bf16[160,128], index: 1, kind: input, shape index: {}]
  %s2 = inlined_call_operand.vmem [shape: f32[1,128], index: 2, kind: input, shape index: {}]
  %s3 = inlined_call_operand.vmem [shape: f32[8,128], index: 3, kind: input, shape index: {}]
  %s4 = inlined_call_operand.hbm [shape: bf16[128,128], index: 4, kind: input, shape index: {}]
  %s5 = inlined_call_operand.vmem [shape: f32[1,128], index: 5, kind: input, shape index: {}]
  %s6 = inlined_call_operand.hbm [shape: f32[8,128], index: 6, kind: output, shape index: {}]
  %s7 = sld [smem:[#allocation0]]
  $region46: #{tpu_custom_call.1} parent=0
    _
  %s9 = ssub.s32 1, %s7
  %s10 = scalar_select 0, %s9, %s7
  $region1: #{tpu_custom_call.1} parent=0
    #allocation2 [shape = 'u8[32768]{0}', space=vmem, size = 0x8000, scoped, tag = 'input window, operand 0, single buffered']
    #allocation3 [shape = 's32[1]{0}', space=sflag, size = 0x4, scoped, tag = 'scoped memory for tpu_custom_call.1']
    #allocation4 [shape = 's32[1]{0}', space=sflag, size = 0x4, scoped, tag = 'scoped memory for tpu_custom_call.1']
    #allocation5 [shape = 'u8[40960]{0}', space=vmem, size = 0xa000, scoped, tag = 'input window, operand 1, single buffered']
    #allocation6 [shape = 's32[1]{0}', space=sflag, size = 0x4, scoped, tag = 'scoped memory for tpu_custom_call.1']
    #allocation7 [shape = 'u8[32768]{0}', space=vmem, size = 0x8000, scoped, tag = 'input window, operand 4, single buffered']
    #allocation8 [shape = 'u8[4096]{0}', space=vmem, size = 0x1000, scoped, tag = 'output window, operand 0, single buffered']
    %11 = vsyncpa [#allocation3], 0
    %12 = vsyncpa [#allocation6], 0
    %13 = vsyncpa [#allocation4], 0
    // Predicated region
    $region2: #{tpu_custom_call.1} parent=1 // pred_check
      _
    $region3: #{tpu_custom_call.1} parent=1 // pred_check_branch
      %15 = sbr.rel (0) target = $region5
    $region4: #{tpu_custom_call.1} parent=1 // pred_region
      %s17 = ssub.s32 1024, 1024
      %18 = vsyncadd [#allocation3], %s17
      %s19 = sshll.u32 [#allocation2], 4
      %s20 = int_to_ptr.vmem [resolvable:$true] %s19
      %25 = dma.hbm_to_vmem [thread:$0]  %s0, 1024, %s20, [#allocation3], 64, 64, 4
    $region5: #{tpu_custom_call.1} parent=1 // pred_fallthru
      _
    // Predicated region
    $region6: #{tpu_custom_call.1} parent=1 // pred_check
      _
    $region7: #{tpu_custom_call.1} parent=1 // pred_check_branch
      %27 = sbr.rel (0) target = $region9
    $region8: #{tpu_custom_call.1} parent=1 // pred_region
      %s29 = ssub.s32 1280, 1280
      %30 = vsyncadd [#allocation6], %s29
      %s31 = sshll.u32 [#allocation5], 4
      %s32 = int_to_ptr.vmem [resolvable:$true] %s31
      %37 = dma.hbm_to_vmem [thread:$0]  %s1, 1280, %s32, [#allocation6], 64, 64, 4
    $region9: #{tpu_custom_call.1} parent=1 // pred_fallthru
      _
    // Predicated region
    $region10: #{tpu_custom_call.1} parent=1 // pred_check
      _
    $region11: #{tpu_custom_call.1} parent=1 // pred_check_branch
      %39 = sbr.rel (0) target = $region13
    $region12: #{tpu_custom_call.1} parent=1 // pred_region
      _
    $region13: #{tpu_custom_call.1} parent=1 // pred_fallthru
      _
    // Predicated region
    $region14: #{tpu_custom_call.1} parent=1 // pred_check
      _
    $region15: #{tpu_custom_call.1} parent=1 // pred_check_branch
      %41 = sbr.rel (0) target = $region17
    $region16: #{tpu_custom_call.1} parent=1 // pred_region
      _
    $region17: #{tpu_custom_call.1} parent=1 // pred_fallthru
      _
    // Predicated region
    $region18: #{tpu_custom_call.1} parent=1 // pred_check
      _
    $region19: #{tpu_custom_call.1} parent=1 // pred_check_branch
      %43 = sbr.rel (0) target = $region21
    $region20: #{tpu_custom_call.1} parent=1 // pred_region
      %s45 = ssub.s32 1024, 1024
      %46 = vsyncadd [#allocation6], %s45
      %s47 = sshll.u32 [#allocation7], 4
      %s48 = int_to_ptr.vmem [resolvable:$true] %s47
      %53 = dma.hbm_to_vmem [thread:$0]  %s4, 1024, %s48, [#allocation6], 64, 64, 4
    $region21: #{tpu_custom_call.1} parent=1 // pred_fallthru
      _
    // Predicated region
    $region22: #{tpu_custom_call.1} parent=1 // pred_check
      _
    $region23: #{tpu_custom_call.1} parent=1 // pred_check_branch
      %55 = sbr.rel (0) target = $region25
    $region24: #{tpu_custom_call.1} parent=1 // pred_region
      _
    $region25: #{tpu_custom_call.1} parent=1 // pred_fallthru
      _
    // Predicated region
    $region26: #{tpu_custom_call.1} parent=1 // pred_check
      _
    $region27: #{tpu_custom_call.1} parent=1 // pred_check_branch
      %57 = sbr.rel (0) target = $region29
    $region28: #{tpu_custom_call.1} parent=1 // pred_region
      %58 = dma.done [#allocation3], 1024
    $region29: #{tpu_custom_call.1} parent=1 // pred_fallthru
      _
    // Predicated region
    $region30: #{tpu_custom_call.1} parent=1 // pred_check
      _
    $region31: #{tpu_custom_call.1} parent=1 // pred_check_branch
      %60 = sbr.rel (0) target = $region33
    $region32: #{tpu_custom_call.1} parent=1 // pred_region
      %61 = dma.done [#allocation6], 1280
    $region33: #{tpu_custom_call.1} parent=1 // pred_fallthru
      _
    // Predicated region
    $region34: #{tpu_custom_call.1} parent=1 // pred_check
      _
    $region35: #{tpu_custom_call.1} parent=1 // pred_check_branch
      %63 = sbr.rel (0) target = $region37
    $region36: #{tpu_custom_call.1} parent=1 // pred_region
      %64 = dma.done [#allocation6], 1024
    $region37: #{tpu_custom_call.1} parent=1 // pred_fallthru
      _
    %v66 = vld [vmem:[#allocation2] sm:$0xf]
    %v67 = vld [vmem:[#allocation2 + $0x4] sm:$0xf]
    %v68 = vld [vmem:[#allocation2 + $0x8] sm:$0xf]
    %v69 = vld [vmem:[#allocation2 + $0xc] sm:$0xf]
    %v70 = vld [vmem:[#allocation2 + $0x10] sm:$0xf]
    %v71 = vld [vmem:[#allocation2 + $0x14] sm:$0xf]
    %v72 = vld [vmem:[#allocation2 + $0x18] sm:$0xf]
    %v73 = vld [vmem:[#allocation2 + $0x1c] sm:$0xf]
    %v74 = vld [vmem:[#allocation2 + $0x20] sm:$0xf]
    %v75 = vld [vmem:[#allocation2 + $0x24] sm:$0xf]
    %v76 = vld [vmem:[#allocation2 + $0x28] sm:$0xf]
    %v77 = vld [vmem:[#allocation2 + $0x2c] sm:$0xf]
    %v78 = vld [vmem:[#allocation2 + $0x30] sm:$0xf]
    %v79 = vld [vmem:[#allocation2 + $0x34] sm:$0xf]
    %v80 = vld [vmem:[#allocation2 + $0x38] sm:$0xf]
    %v81 = vld [vmem:[#allocation2 + $0x3c] sm:$0xf]
    %v98 = vunpack.c.l.b16 %v66
    %v99 = vunpack.c.l.b16 %v67
    %v100 = vunpack.c.l.b16 %v68
    %v101 = vunpack.c.l.b16 %v69
    %v102 = vunpack.c.l.b16 %v70
    %v103 = vunpack.c.l.b16 %v71
    %v104 = vunpack.c.l.b16 %v72
    %v105 = vunpack.c.l.b16 %v73
    %v106 = vunpack.c.l.b16 %v74
    %v107 = vunpack.c.l.b16 %v75
    %v108 = vunpack.c.l.b16 %v76
    %v109 = vunpack.c.l.b16 %v77
    %v110 = vunpack.c.l.b16 %v78
    %v111 = vunpack.c.l.b16 %v79
    %v112 = vunpack.c.l.b16 %v80
    %v113 = vunpack.c.l.b16 %v81
    %v114 = vpack.c.b16 %v99, %v98
    %v115 = vpack.c.b16 %v101, %v100
    %v116 = vpack.c.b16 %v103, %v102
    %v117 = vpack.c.b16 %v105, %v104
    %v118 = vpack.c.b16 %v107, %v106
    %v119 = vpack.c.b16 %v109, %v108
    %v120 = vpack.c.b16 %v111, %v110
    %v121 = vpack.c.b16 %v113, %v112
    %v123 = vshrl.u32 %v114, 16
    %v125 = vshll.u32 %v114, 16
    %v127 = vrot.slane %v125, 1
    %v128 = vor.u32 %v123, %v127
    %v130 = vshrl.u32 %v115, 16
    %v132 = vshll.u32 %v115, 16
    %v134 = vrot.slane %v132, 1
    %v135 = vor.u32 %v130, %v134
    %v137 = vshrl.u32 %v116, 16
    %v139 = vshll.u32 %v116, 16
    %v141 = vrot.slane %v139, 1
    %v142 = vor.u32 %v137, %v141
    %v144 = vshrl.u32 %v117, 16
    %v146 = vshll.u32 %v117, 16
    %v148 = vrot.slane %v146, 1
    %v149 = vor.u32 %v144, %v148
    %v151 = vshrl.u32 %v118, 16
    %v153 = vshll.u32 %v118, 16
    %v155 = vrot.slane %v153, 1
    %v156 = vor.u32 %v151, %v155
    %v158 = vshrl.u32 %v119, 16
    %v160 = vshll.u32 %v119, 16
    %v162 = vrot.slane %v160, 1
    %v163 = vor.u32 %v158, %v162
    %v165 = vshrl.u32 %v120, 16
    %v167 = vshll.u32 %v120, 16
    %v169 = vrot.slane %v167, 1
    %v170 = vor.u32 %v165, %v169
    %v172 = vshrl.u32 %v121, 16
    %v174 = vshll.u32 %v121, 16
    %v176 = vrot.slane %v174, 1
    %v177 = vor.u32 %v172, %v176
    %178 = vrot.lane.b32.xlu0 %v128, 32
    %v179 = vpop.permute.xlu0 %178
    %180 = vrot.lane.b32.xlu0 %v135, 32
    %v181 = vpop.permute.xlu0 %180
    %182 = vrot.lane.b32.xlu0 %v142, 32
    %v183 = vpop.permute.xlu0 %182
    %184 = vrot.lane.b32.xlu0 %v149, 32
    %v185 = vpop.permute.xlu0 %184
    %186 = vrot.lane.b32.xlu0 %v156, 32
    %v187 = vpop.permute.xlu0 %186
    %188 = vrot.lane.b32.xlu0 %v163, 32
    %v189 = vpop.permute.xlu0 %188
    %190 = vrot.lane.b32.xlu0 %v170, 32
    %v191 = vpop.permute.xlu0 %190
    %192 = vrot.lane.b32.xlu0 %v177, 32
    %v193 = vpop.permute.xlu0 %192
    %v194 = vrot.slane %v114, 1
    %v195 = vrot.slane %v115, 1
    %v196 = vrot.slane %v116, 1
    %v197 = vrot.slane %v117, 1
    %v198 = vrot.slane %v118, 1
    %v199 = vrot.slane %v119, 1
    %v200 = vrot.slane %v120, 1
    %v201 = vrot.slane %v121, 1
    %202 = vrot.lane.b32.xlu0 %v194, 64
    %v203 = vpop.permute.xlu0 %202
    %204 = vrot.lane.b32.xlu0 %v195, 64
    %v205 = vpop.permute.xlu0 %204
    %206 = vrot.lane.b32.xlu0 %v196, 64
    %v207 = vpop.permute.xlu0 %206
    %208 = vrot.lane.b32.xlu0 %v197, 64
    %v209 = vpop.permute.xlu0 %208
    %210 = vrot.lane.b32.xlu0 %v198, 64
    %v211 = vpop.permute.xlu0 %210
    %212 = vrot.lane.b32.xlu0 %v199, 64
    %v213 = vpop.permute.xlu0 %212
    %214 = vrot.lane.b32.xlu0 %v200, 64
    %v215 = vpop.permute.xlu0 %214
    %216 = vrot.lane.b32.xlu0 %v201, 64
    %v217 = vpop.permute.xlu0 %216
    %v218 = vrot.slane %v123, 1
    %v219 = vrot.slane %v125, 2
    %v220 = vor.u32 %v218, %v219
    %v221 = vrot.slane %v130, 1
    %v222 = vrot.slane %v132, 2
    %v223 = vor.u32 %v221, %v222
    %v224 = vrot.slane %v137, 1
    %v225 = vrot.slane %v139, 2
    %v226 = vor.u32 %v224, %v225
    %v227 = vrot.slane %v144, 1
    %v228 = vrot.slane %v146, 2
    %v229 = vor.u32 %v227, %v228
    %v230 = vrot.slane %v151, 1
    %v231 = vrot.slane %v153, 2
    %v232 = vor.u32 %v230, %v231
    %v233 = vrot.slane %v158, 1
    %v234 = vrot.slane %v160, 2
    %v235 = vor.u32 %v233, %v234
    %v236 = vrot.slane %v165, 1
    %v237 = vrot.slane %v167, 2
    %v238 = vor.u32 %v236, %v237
    %v239 = vrot.slane %v172, 1
    %v240 = vrot.slane %v174, 2
    %v241 = vor.u32 %v239, %v240
    %242 = vrot.lane.b32.xlu0 %v220, 96
    %v243 = vpop.permute.xlu0 %242
    %244 = vrot.lane.b32.xlu0 %v223, 96
    %v245 = vpop.permute.xlu0 %244
    %246 = vrot.lane.b32.xlu0 %v226, 96
    %v247 = vpop.permute.xlu0 %246
    %248 = vrot.lane.b32.xlu0 %v229, 96
    %v249 = vpop.permute.xlu0 %248
    %250 = vrot.lane.b32.xlu0 %v232, 96
    %v251 = vpop.permute.xlu0 %250
    %252 = vrot.lane.b32.xlu0 %v235, 96
    %v253 = vpop.permute.xlu0 %252
    %254 = vrot.lane.b32.xlu0 %v238, 96
    %v255 = vpop.permute.xlu0 %254
    %256 = vrot.lane.b32.xlu0 %v241, 96
    %v257 = vpop.permute.xlu0 %256
    %v258 = vrot.slane %v114, 2
    %v259 = vrot.slane %v115, 2
    %v260 = vrot.slane %v116, 2
    %v261 = vrot.slane %v117, 2
    %v262 = vrot.slane %v118, 2
    %v263 = vrot.slane %v119, 2
    %v264 = vrot.slane %v120, 2
    %v265 = vrot.slane %v121, 2
    %vm266 = vcmask 261120
    %v269 = vsel %vm266, %v66, %v179
    %v272 = vsel %vm266, %v68, %v181
    %v275 = vsel %vm266, %v70, %v183
    %v278 = vsel %vm266, %v72, %v185
    %v281 = vsel %vm266, %v74, %v187
    %v284 = vsel %vm266, %v76, %v189
    %v287 = vsel %vm266, %v78, %v191
    %v290 = vsel %vm266, %v80, %v193
    %vm291 = vcmask 523264
    %v293 = vsel %vm291, %v269, %v203
    %v295 = vsel %vm291, %v272, %v205
    %v297 = vsel %vm291, %v275, %v207
    %v299 = vsel %vm291, %v278, %v209
    %v301 = vsel %vm291, %v281, %v211
    %v303 = vsel %vm291, %v284, %v213
    %v305 = vsel %vm291, %v287, %v215
    %v307 = vsel %vm291, %v290, %v217
    %vm308 = vcmask 785408
    %v310 = vsel %vm308, %v293, %v243
    %v312 = vsel %vm308, %v295, %v245
    %v314 = vsel %vm308, %v297, %v247
    %v316 = vsel %vm308, %v299, %v249
    %v318 = vsel %vm308, %v301, %v251
    %v320 = vsel %vm308, %v303, %v253
    %v322 = vsel %vm308, %v305, %v255
    %v324 = vsel %vm308, %v307, %v257
    %v325 = vld [vmem:[#allocation5] sm:$0xf]
    %v326 = vld [vmem:[#allocation5 + $0x4] sm:$0xf]
    %v327 = vld [vmem:[#allocation5 + $0x8] sm:$0xf]
    %v328 = vld [vmem:[#allocation5 + $0xc] sm:$0xf]
    %v329 = vld [vmem:[#allocation5 + $0x10] sm:$0xf]
    %v330 = vld [vmem:[#allocation5 + $0x14] sm:$0xf]
    %v331 = vld [vmem:[#allocation5 + $0x18] sm:$0xf]
    %v332 = vld [vmem:[#allocation5 + $0x1c] sm:$0xf]
    %v333 = vld [vmem:[#allocation5 + $0x20] sm:$0xf]
    %v334 = vld [vmem:[#allocation5 + $0x24] sm:$0xf]
    %v335 = vld [vmem:[#allocation5 + $0x28] sm:$0xf]
    %v336 = vld [vmem:[#allocation5 + $0x2c] sm:$0xf]
    %v337 = vld [vmem:[#allocation5 + $0x30] sm:$0xf]
    %v338 = vld [vmem:[#allocation5 + $0x34] sm:$0xf]
    %v339 = vld [vmem:[#allocation5 + $0x38] sm:$0xf]
    %v340 = vld [vmem:[#allocation5 + $0x3c] sm:$0xf]
    %v341 = vld [vmem:[#allocation5 + $0x40] sm:$0xf]
    %v342 = vld [vmem:[#allocation5 + $0x44] sm:$0xf]
    %v343 = vld [vmem:[#allocation5 + $0x48] sm:$0xf]
    %v344 = vld [vmem:[#allocation5 + $0x4c] sm:$0xf]
    %v345 = vld [vmem:[%s2] sm:$0x1]
    %v347 = vlaneseq
    %v348 = vshrl.u32 %v347, 7
    %v349 = vsub.s32 0, %v348
    %v350 = vrot.slane %v345, %v349
    %v360 = vunpack.c.l.b16 %v310
    %v361 = vunpack.c.l.b16 %v258
    %v362 = vunpack.c.l.b16 %v312
    %v363 = vunpack.c.l.b16 %v259
    %v364 = vunpack.c.l.b16 %v314
    %v365 = vunpack.c.l.b16 %v260
    %v366 = vunpack.c.l.b16 %v316
    %v367 = vunpack.c.l.b16 %v261
    %v368 = vunpack.c.l.b16 %v318
    %v369 = vunpack.c.l.b16 %v262
    %v370 = vunpack.c.l.b16 %v320
    %v371 = vunpack.c.l.b16 %v263
    %v372 = vunpack.c.l.b16 %v322
    %v373 = vunpack.c.l.b16 %v264
    %v374 = vunpack.c.l.b16 %v324
    %v375 = vunpack.c.l.b16 %v265
    %v376 = vpack.c.b16 %v362, %v360
    %v377 = vpack.c.b16 %v363, %v361
    %v378 = vpack.c.b16 %v366, %v364
    %v379 = vpack.c.b16 %v367, %v365
    %v380 = vpack.c.b16 %v370, %v368
    %v381 = vpack.c.b16 %v371, %v369
    %v382 = vpack.c.b16 %v374, %v372
    %v383 = vpack.c.b16 %v375, %v373
    %v408 = vunpack.c.l.b16 %v325
    %v409 = vunpack.c.l.b16 %v326
    %v410 = vunpack.c.l.b16 %v327
    %v411 = vunpack.c.l.b16 %v328
    %v412 = vunpack.c.l.b16 %v329
    %v413 = vunpack.c.l.b16 %v330
    %v414 = vunpack.c.l.b16 %v331
    %v415 = vunpack.c.l.b16 %v332
    %v416 = vunpack.c.l.b16 %v333
    %v417 = vunpack.c.l.b16 %v334
    %v418 = vunpack.c.l.b16 %v335
    %v419 = vunpack.c.l.b16 %v336
    %v420 = vunpack.c.l.b16 %v337
    %v421 = vunpack.c.l.b16 %v338
    %v422 = vunpack.c.l.b16 %v339
    %v423 = vunpack.c.l.b16 %v340
    %v424 = vunpack.c.l.b16 %v341
    %v425 = vunpack.c.l.b16 %v342
    %v426 = vunpack.c.l.b16 %v343
    %v427 = vunpack.c.l.b16 %v344
    %v428 = vpack.c.b16 %v409, %v408
    %v429 = vpack.c.b16 %v411, %v410
    %v430 = vpack.c.b16 %v413, %v412
    %v431 = vpack.c.b16 %v415, %v414
    %v432 = vpack.c.b16 %v417, %v416
    %v433 = vpack.c.b16 %v419, %v418
    %v434 = vpack.c.b16 %v421, %v420
    %v435 = vpack.c.b16 %v423, %v422
    %v436 = vpack.c.b16 %v425, %v424
    %v437 = vpack.c.b16 %v427, %v426
    %v449 = vsel %vm266, %v377, 0
    %v452 = vsel %vm266, %v379, 0
    %v455 = vsel %vm266, %v381, 0
    %v458 = vsel %vm266, %v383, 0
    %460 = vmatprep.subr.bf16.mxu0 0
    %461 = vmatpush1.bf16.msra.mxu0 %v428
    %462 = vmatprep.subr.bf16.mxu0 0
    %463 = vmatpush1.bf16.msra.mxu0 %v429
    %464 = vmatprep.subr.bf16.mxu0 0
    %465 = vmatpush1.bf16.msra.mxu0 %v430
    %466 = vmatprep.subr.bf16.mxu0 0
    %467 = vmatpush1.bf16.msra.mxu0 %v431
    %468 = vmatprep.subr.bf16.mxu0 0
    %469 = vmatpush1.bf16.msra.mxu0 %v432
    %470 = vmatprep.subr.bf16.mxu0 0
    %471 = vmatpush1.bf16.msra.mxu0 %v433
    %472 = vmatprep.subr.bf16.mxu0 0
    %473 = vmatpush1.bf16.msra.mxu0 %v434
    %474 = vmatprep.subr.bf16.mxu0 0
    %475 = vmatpush1.bf16.msra.mxu0 %v435
    %476 = vmatprep.subr.bf16.mxu0 0
    %477 = vmatpush1.bf16.msra.mxu0 %v436
    %478 = vmatprep.subr.bf16.mxu0 0
    %479 = vmatpush1.bf16.msra.mxu0 %v437
    %480 = vmatprep.subr.bf16.mxu0 0
    %481 = vmatpush1.bf16.msra.mxu0 0
    %482 = vmatprep.subr.bf16.mxu0 0
    %483 = vmatpush1.bf16.msra.mxu0 0
    %484 = vmatprep.subr.bf16.mxu0 0
    %485 = vmatpush1.bf16.msra.mxu0 0
    %486 = vmatprep.subr.bf16.mxu0 0
    %487 = vmatpush1.bf16.msra.mxu0 0
    %488 = vmatprep.subr.bf16.mxu0 0
    %489 = vmatpush1.bf16.msra.mxu0 0
    %490 = vmatprep.subr.bf16.mxu0 0
    %491 = vmatpush1.bf16.msra.mxu0 0
    %492 = vmatprep.mubr.bf16.mxu0 %v449
    %493 = vmatmul.mubr.bf16.gmra.mrb[0].mxu0 %v376
    %v494 = vpop.f32.mrb[0].mxu0
    %v495 = vadd.f32 %v350, %v494
    %v496 = vpop.f32.mrb[0].mxu0
    %v497 = vpop.f32.mrb[0].mxu0
    %v498 = vadd.f32 %v350, %v497
    %v499 = vpop.f32.mrb[0].mxu0
    %500 = vmatprep.mubr.bf16.mxu0 %v452
    %501 = vmatmul.mubr.bf16.gmra.mrb[0].mxu0 %v378
    %v502 = vpop.f32.mrb[0].mxu0
    %v503 = vadd.f32 %v350, %v502
    %v504 = vpop.f32.mrb[0].mxu0
    %v505 = vpop.f32.mrb[0].mxu0
    %v506 = vadd.f32 %v350, %v505
    %v507 = vpop.f32.mrb[0].mxu0
    %508 = vmatprep.mubr.bf16.mxu0 %v455
    %509 = vmatmul.mubr.bf16.gmra.mrb[0].mxu0 %v380
    %v510 = vpop.f32.mrb[0].mxu0
    %v511 = vadd.f32 %v350, %v510
    %v512 = vpop.f32.mrb[0].mxu0
    %v513 = vpop.f32.mrb[0].mxu0
    %v514 = vadd.f32 %v350, %v513
    %v515 = vpop.f32.mrb[0].mxu0
    %516 = vmatprep.mubr.bf16.mxu0 %v458
    %517 = vmatmul.mubr.bf16.gmra.mrb[0].mxu0 %v382
    %v518 = vpop.f32.mrb[0].mxu0
    %v519 = vadd.f32 %v350, %v518
    %v520 = vpop.f32.mrb[0].mxu0
    %v521 = vpop.f32.mrb[0].mxu0
    %v522 = vadd.f32 %v350, %v521
    %v523 = vpop.f32.mrb[0].mxu0
    %524 = vdwg.mxu0
    %v525 = vmax.f32 %v495, 0.0
    %v526 = vmax.f32 %v498, 0.0
    %v527 = vmax.f32 %v503, 0.0
    %v528 = vmax.f32 %v506, 0.0
    %v529 = vmax.f32 %v511, 0.0
    %v530 = vmax.f32 %v514, 0.0
    %v531 = vmax.f32 %v519, 0.0
    %v532 = vmax.f32 %v522, 0.0
    %v533 = vld [vmem:[%s3] sm:$0xff]
    %v534 = vmul.f32 %v525, %v533
    %v535 = vmul.f32 %v526, %v533
    %v536 = vmul.f32 %v527, %v533
    %v537 = vmul.f32 %v528, %v533
    %v538 = vmul.f32 %v529, %v533
    %v539 = vmul.f32 %v530, %v533
    %v540 = vmul.f32 %v531, %v533
    %v541 = vmul.f32 %v532, %v533
    %v542 = vrot.slane %v534, 4
    %v543 = vmax.f32 %v534, %v542
    %v544 = vrot.slane %v543, 2
    %v545 = vmax.f32 %v543, %v544
    %v546 = vrot.slane %v545, 1
    %v547 = vmax.f32 %v545, %v546
    %v548 = vrot.slane %v535, 4
    %v549 = vmax.f32 %v535, %v548
    %v550 = vrot.slane %v549, 2
    %v551 = vmax.f32 %v549, %v550
    %v552 = vrot.slane %v551, 1
    %v553 = vmax.f32 %v551, %v552
    %v554 = vrot.slane %v536, 4
    %v555 = vmax.f32 %v536, %v554
    %v556 = vrot.slane %v555, 2
    %v557 = vmax.f32 %v555, %v556
    %v558 = vrot.slane %v557, 1
    %v559 = vmax.f32 %v557, %v558
    %v560 = vrot.slane %v537, 4
    %v561 = vmax.f32 %v537, %v560
    %v562 = vrot.slane %v561, 2
    %v563 = vmax.f32 %v561, %v562
    %v564 = vrot.slane %v563, 1
    %v565 = vmax.f32 %v563, %v564
    %v566 = vrot.slane %v538, 4
    %v567 = vmax.f32 %v538, %v566
    %v568 = vrot.slane %v567, 2
    %v569 = vmax.f32 %v567, %v568
    %v570 = vrot.slane %v569, 1
    %v571 = vmax.f32 %v569, %v570
    %v572 = vrot.slane %v539, 4
    %v573 = vmax.f32 %v539, %v572
    %v574 = vrot.slane %v573, 2
    %v575 = vmax.f32 %v573, %v574
    %v576 = vrot.slane %v575, 1
    %v577 = vmax.f32 %v575, %v576
    %v578 = vrot.slane %v540, 4
    %v579 = vmax.f32 %v540, %v578
    %v580 = vrot.slane %v579, 2
    %v581 = vmax.f32 %v579, %v580
    %v582 = vrot.slane %v581, 1
    %v583 = vmax.f32 %v581, %v582
    %v584 = vrot.slane %v541, 4
    %v585 = vmax.f32 %v541, %v584
    %v586 = vrot.slane %v585, 2
    %v587 = vmax.f32 %v585, %v586
    %v588 = vrot.slane %v587, 1
    %v589 = vmax.f32 %v587, %v588
    %v590 = vpack.c.bf16 %v547, %v547
    %v591 = vpack.c.bf16 %v553, %v553
    %v592 = vpack.c.bf16 %v559, %v559
    %v593 = vpack.c.bf16 %v565, %v565
    %v594 = vpack.c.bf16 %v571, %v571
    %v595 = vpack.c.bf16 %v577, %v577
    %v596 = vpack.c.bf16 %v583, %v583
    %v597 = vpack.c.bf16 %v589, %v589
    %v598 = vld [vmem:[#allocation7] sm:$0xf]
    %v599 = vld [vmem:[#allocation7 + $0x4] sm:$0xf]
    %v600 = vld [vmem:[#allocation7 + $0x8] sm:$0xf]
    %v601 = vld [vmem:[#allocation7 + $0xc] sm:$0xf]
    %v602 = vld [vmem:[#allocation7 + $0x10] sm:$0xf]
    %v603 = vld [vmem:[#allocation7 + $0x14] sm:$0xf]
    %v604 = vld [vmem:[#allocation7 + $0x18] sm:$0xf]
    %v605 = vld [vmem:[#allocation7 + $0x1c] sm:$0xf]
    %v606 = vld [vmem:[#allocation7 + $0x20] sm:$0xf]
    %v607 = vld [vmem:[#allocation7 + $0x24] sm:$0xf]
    %v608 = vld [vmem:[#allocation7 + $0x28] sm:$0xf]
    %v609 = vld [vmem:[#allocation7 + $0x2c] sm:$0xf]
    %v610 = vld [vmem:[#allocation7 + $0x30] sm:$0xf]
    %v611 = vld [vmem:[#allocation7 + $0x34] sm:$0xf]
    %v612 = vld [vmem:[#allocation7 + $0x38] sm:$0xf]
    %v613 = vld [vmem:[#allocation7 + $0x3c] sm:$0xf]
    %v614 = vld [vmem:[%s5] sm:$0x1]
    %v616 = vlaneseq
    %v617 = vshrl.u32 %v616, 7
    %v618 = vsub.s32 0, %v617
    %v619 = vrot.slane %v614, %v618
    %v629 = vunpack.c.l.b16 %v590
    %v630 = vunpack.c.l.b16 %v591
    %v631 = vunpack.c.l.b16 %v592
    %v632 = vunpack.c.l.b16 %v593
    %v633 = vunpack.c.l.b16 %v594
    %v634 = vunpack.c.l.b16 %v595
    %v635 = vunpack.c.l.b16 %v596
    %v636 = vunpack.c.l.b16 %v597
    %vm637 = vcmask 1041409
    %v638 = vsel %vm637, %v630, %v629
    %vm639 = vcmask 1042434
    %v640 = vsel %vm639, %v631, %v638
    %vm641 = vcmask 1043459
    %v642 = vsel %vm641, %v632, %v640
    %vm643 = vcmask 1044484
    %v644 = vsel %vm643, %v633, %v642
    %vm645 = vcmask 1045509
    %v646 = vsel %vm645, %v634, %v644
    %vm647 = vcmask 1046534
    %v648 = vsel %vm647, %v635, %v646
    %vm649 = vcmask 1047559
    %v650 = vsel %vm649, %v636, %v648
    %v651 = vpack.c.b16 %v650, %v650
    %v669 = vunpack.c.l.b16 %v598
    %v670 = vunpack.c.l.b16 %v599
    %v671 = vunpack.c.l.b16 %v600
    %v672 = vunpack.c.l.b16 %v601
    %v673 = vunpack.c.l.b16 %v602
    %v674 = vunpack.c.l.b16 %v603
    %v675 = vunpack.c.l.b16 %v604
    %v676 = vunpack.c.l.b16 %v605
    %v677 = vunpack.c.l.b16 %v606
    %v678 = vunpack.c.l.b16 %v607
    %v679 = vunpack.c.l.b16 %v608
    %v680 = vunpack.c.l.b16 %v609
    %v681 = vunpack.c.l.b16 %v610
    %v682 = vunpack.c.l.b16 %v611
    %v683 = vunpack.c.l.b16 %v612
    %v684 = vunpack.c.l.b16 %v613
    %v685 = vpack.c.b16 %v670, %v669
    %v686 = vpack.c.b16 %v672, %v671
    %v687 = vpack.c.b16 %v674, %v673
    %v688 = vpack.c.b16 %v676, %v675
    %v689 = vpack.c.b16 %v678, %v677
    %v690 = vpack.c.b16 %v680, %v679
    %v691 = vpack.c.b16 %v682, %v681
    %v692 = vpack.c.b16 %v684, %v683
    %701 = vmatprep.subr.bf16.mxu0 0
    %702 = vmatpush1.bf16.msra.mxu0 %v685
    %703 = vmatprep.subr.bf16.mxu0 0
    %704 = vmatpush1.bf16.msra.mxu0 %v686
    %705 = vmatprep.subr.bf16.mxu0 0
    %706 = vmatpush1.bf16.msra.mxu0 %v687
    %707 = vmatprep.subr.bf16.mxu0 0
    %708 = vmatpush1.bf16.msra.mxu0 %v688
    %709 = vmatprep.subr.bf16.mxu0 0
    %710 = vmatpush1.bf16.msra.mxu0 %v689
    %711 = vmatprep.subr.bf16.mxu0 0
    %712 = vmatpush1.bf16.msra.mxu0 %v690
    %713 = vmatprep.subr.bf16.mxu0 0
    %714 = vmatpush1.bf16.msra.mxu0 %v691
    %715 = vmatprep.subr.bf16.mxu0 0
    %716 = vmatpush1.bf16.msra.mxu0 %v692
    %717 = vmatprep.subr.bf16.mxu0 0
    %718 = vmatpush1.bf16.msra.mxu0 0
    %719 = vmatprep.subr.bf16.mxu0 0
    %720 = vmatpush1.bf16.msra.mxu0 0
    %721 = vmatprep.subr.bf16.mxu0 0
    %722 = vmatpush1.bf16.msra.mxu0 0
    %723 = vmatprep.subr.bf16.mxu0 0
    %724 = vmatpush1.bf16.msra.mxu0 0
    %725 = vmatprep.subr.bf16.mxu0 0
    %726 = vmatpush1.bf16.msra.mxu0 0
    %727 = vmatprep.subr.bf16.mxu0 0
    %728 = vmatpush1.bf16.msra.mxu0 0
    %729 = vmatprep.subr.bf16.mxu0 0
    %730 = vmatpush1.bf16.msra.mxu0 0
    %731 = vmatprep.subr.bf16.mxu0 0
    %732 = vmatpush1.bf16.msra.mxu0 0
    %733 = vmatprep.mubr.bf16.mxu0 0
    %734 = vmatmul.mubr.bf16.gmra.mrb[0].mxu0 %v651
    %v735 = vpop.f32.mrb[0].mxu0
    %v736 = vadd.f32 %v619, %v735
    %v737 = vpop.f32.mrb[0].mxu0
    %v738 = vpop.f32.mrb[0].mxu0
    %v739 = vpop.f32.mrb[0].mxu0
    %740 = vdwg.mxu0
    %v741 = vmax.f32 %v736, 0.0
    %742 = vst [vmem:[#allocation8] sm:$0xff] %v741
    // Predicated region
    $region38: #{tpu_custom_call.1} parent=1 // pred_check
      _
    $region39: #{tpu_custom_call.1} parent=1 // pred_check_branch
      %744 = sbr.rel (0) target = $region41
    $region40: #{tpu_custom_call.1} parent=1 // pred_region
      %s746 = ssub.s32 128, 128
      %747 = vsyncadd [#allocation4], %s746
      %s749 = sshll.u32 [#allocation8], 4
      %s750 = int_to_ptr.vmem [resolvable:$true] %s749
      %752 = dma.vmem_to_hbm [thread:$0]  %s750, 128, %s6, [#allocation4]
    $region41: #{tpu_custom_call.1} parent=1 // pred_fallthru
      _
    // Predicated region
    $region42: #{tpu_custom_call.1} parent=1 // pred_check
      _
    $region43: #{tpu_custom_call.1} parent=1 // pred_check_branch
      %754 = sbr.rel (0) target = $region45
    $region44: #{tpu_custom_call.1} parent=1 // pred_region
      %755 = dma.done [#allocation4], 128
    $region45: #{tpu_custom_call.1} parent=1 // pred_fallthru
      _
    %756 = vsyncpa [#allocation3], 1
    %757 = vsyncpa [#allocation6], 1
    %758 = vsyncpa [#allocation4], 1

</llo_original>
